<compile_context>
chip_gen: v5e
topology: v5e:2x2
jax: 0.10.0
libtpu: 0.0.40
codegen_flags: <defaults>
</compile_context>

<pallas_src>
import functools

import jax
import jax.numpy as jnp
from jax.experimental import pallas as pl
from jax.experimental.pallas import tpu as pltpu


def _label_smoothing_kernel(pred_ref, tgt_ref, out_ref, *,
                            smoothing, confidence, num_classes, n_total, tile_n):
    # Single upcast to f32 for the softmax math (counted in the VMEM budget).
    x = pred_ref[...].astype(jnp.float32)             # (TILE_N, C)
    tgt = tgt_ref[...]                                 # (TILE_N, 1) int32

    smooth_val = smoothing / (num_classes - 1)

    # log-sum-exp over the class (lane) axis: cross-lane reductions #1 and #2.
    m = jnp.max(x, axis=-1, keepdims=True)             # (T, 1)
    s = jnp.sum(jnp.exp(x - m), axis=-1, keepdims=True)
    lse = m + jnp.log(s)                               # (T, 1) = logsumexp(x)

    # Fused smoothed-target weighting: reduction #3.
    # true_dist weights sum to 1 (confidence + (C-1)*smooth_val == 1), so
    #   loss_row = sum_c w_c * (lse - x_c) = lse - sum_c w_c * x_c
    class_ids = jax.lax.broadcasted_iota(jnp.int32, x.shape, 1)
    w = jnp.where(class_ids == tgt,
                  jnp.float32(confidence), jnp.float32(smooth_val))
    per_row = lse - jnp.sum(w * x, axis=-1, keepdims=True)   # (T, 1)

    # Rows past the true batch size (partial last block; pred is NOT padded in
    # HBM) contain garbage -> select-mask (never multiply) before any use.
    i = pl.program_id(0)
    row_ids = i * tile_n + jax.lax.broadcasted_iota(jnp.int32, (tile_n, 1), 0)
    out_ref[...] = jnp.where(row_ids < n_total, per_row, 0.0)


def _round_up(x, m):
    return ((x + m - 1) // m) * m


def _vmem_capacity_bytes():
    try:
        return int(pltpu.get_tpu_info().vmem_capacity_bytes)
    except Exception:
        return 64 * 1024 * 1024   # conservative fallback (v7x per-TC VMEM)


def _choose_tile_n(n, c, itemsize):
    vmem_cap = _vmem_capacity_bytes()
    # Budget for double-buffered pred tiles + ~3 f32 in-kernel temporaries:
    # ~28-32 MiB per TensorCore on v7x (64 MiB VMEM), ~40 MiB on v5e/v6e.
    budget = min(int(0.45 * vmem_cap), 40 * 1024 * 1024)
    # 2x input double-buffer + f32 upcast/exp/weight temps + tiny tgt/out bufs.
    per_row_bytes = c * (2 * itemsize + 3 * 4) + 32
    max_rows = max(budget // per_row_bytes, 8)
    # Target ~4 MiB of pred per block for per-step-overhead amortization.
    target_rows = max((4 * 1024 * 1024) // (c * itemsize), 8)
    tile = min(max_rows, target_rows)
    # Keep >= 2 grid steps so the 'parallel' axis can shard across v7x's 2 TCs.
    tile = min(tile, _round_up(pl.cdiv(n, 2), 8), _round_up(n, 8))
    tile = max(8, (tile // 8) * 8)                      # sublane-aligned
    return tile, budget, vmem_cap


def label_smoothing_loss(pred, target, smoothing=0.1):
    """pred: (N, C) logits (any float dtype); target: (N,) int class ids. -> scalar f32."""
    n, c = pred.shape
    assert c > 1, "LabelSmoothingLoss needs C > 1 (smoothing / (C - 1))."
    confidence = 1.0 - smoothing
    itemsize = jnp.dtype(pred.dtype).itemsize

    tile_n, budget, vmem_cap = _choose_tile_n(n, c, itemsize)
    num_tiles = pl.cdiv(n, tile_n)

    # No jnp.pad of pred: partial last block is tolerated and masked in-kernel.
    tgt2d = target.astype(jnp.int32).reshape(n, 1)

    kernel = functools.partial(
        _label_smoothing_kernel,
        smoothing=float(smoothing),
        confidence=float(confidence),
        num_classes=c,
        n_total=n,
        tile_n=tile_n,
    )

    vmem_limit = min(int(0.75 * vmem_cap), budget + 16 * 1024 * 1024)

    per_row = pl.pallas_call(
        kernel,
        out_shape=jax.ShapeDtypeStruct((n, 1), jnp.float32),
        grid_spec=pltpu.PrefetchScalarGridSpec(
            num_scalar_prefetch=0,
            grid=(num_tiles,),
            in_specs=[
                pl.BlockSpec((tile_n, c), lambda i: (i, 0)),   # batch-tiled logits
                pl.BlockSpec((tile_n, 1), lambda i: (i, 0)),   # batch-tiled targets
            ],
            out_specs=pl.BlockSpec((tile_n, 1), lambda i: (i, 0)),
        ),
        compiler_params=pltpu.CompilerParams(
            dimension_semantics=("parallel",),                  # megacore-friendly
            vmem_limit_bytes=vmem_limit,
        ),
        cost_estimate=pl.CostEstimate(
            flops=5 * n * c,
            transcendentals=n * c,
            bytes_accessed=n * c * itemsize + 2 * n * 4,
        ),
    )(pred, tgt2d)

    # Mean over the *global* batch size (masked rows contribute 0).
    return jnp.sum(per_row) / jnp.float32(n)


def _reference(pred, target, smoothing=0.1):
    pred = pred.astype(jnp.float32)
    confidence = 1.0 - smoothing
    c = pred.shape[-1]
    logp = jax.nn.log_softmax(pred, axis=-1)
    true_dist = jnp.full_like(logp, smoothing / (c - 1))
    true_dist = true_dist.at[jnp.arange(pred.shape[0]), target].set(confidence)
    return jnp.mean(jnp.sum(-true_dist * logp, axis=-1))


if __name__ == "__main__":
    key = jax.random.PRNGKey(0)
    k1, k2, k3, k4 = jax.random.split(key, 4)

    # Case 1: bf16 logits, batch NOT a multiple of the row tile
    #         -> exercises native-dtype input, un-padded partial last block,
    #            and the in-kernel row mask.
    N, C = 12, 256
    pred_bf16 = jax.random.normal(k1, (N, C), dtype=jnp.float32).astype(jnp.bfloat16)
    target = jax.random.randint(k2, (N,), 0, C, dtype=jnp.int32)

    loss = jax.block_until_ready(label_smoothing_loss(pred_bf16, target, smoothing=0.1))
    ref = _reference(pred_bf16, target, smoothing=0.1)
    assert jnp.allclose(loss, ref, atol=1e-4, rtol=1e-4), (loss, ref)

    # Case 2: f32 logits, batch a multiple of the row tile.
    N2, C2 = 32, 128
    pred_f32 = jax.random.normal(k3, (N2, C2), dtype=jnp.float32)
    target2 = jax.random.randint(k4, (N2,), 0, C2, dtype=jnp.int32)

    loss2 = jax.block_until_ready(label_smoothing_loss(pred_f32, target2, smoothing=0.1))
    ref2 = _reference(pred_f32, target2, smoothing=0.1)
    assert jnp.allclose(loss2, ref2, atol=1e-5, rtol=1e-5), (loss2, ref2)

    print("KERNEL_OK")
</pallas_src>

<mosaic_0001>
module attributes {stable_mosaic.version = 11 : i64} {
  func.func @_label_smoothing_kernel(%arg0: i32, %arg1: memref<8x256xbf16, #tpu.memory_space<vmem>>, %arg2: memref<8x1xi32, #tpu.memory_space<vmem>>, %arg3: memref<8x1xf32, #tpu.memory_space<vmem>>) attributes {dimension_semantics = [#tpu.dimension_semantics<parallel>], iteration_bounds = array<i64: 2>, scalar_prefetch = 0 : i64, scratch_operands = 0 : i64, tpu.core_type = #tpu.core_type<tc>, window_params = [{transform_indices = @transform_0, window_bounds = array<i64: 8, 256>}, {transform_indices = @transform_1, window_bounds = array<i64: 8, 1>}, {transform_indices = @transform_2, window_bounds = array<i64: 8, 1>}]} {
    %c0 = arith.constant 0 : index
    %c0_0 = arith.constant 0 : index
    %0 = vector.load %arg1[%c0, %c0_0] : memref<8x256xbf16, #tpu.memory_space<vmem>>, vector<8x256xbf16>
    %1 = arith.extf %0 : vector<8x256xbf16> to vector<8x256xf32>
    %c0_1 = arith.constant 0 : index
    %c0_2 = arith.constant 0 : index
    %2 = vector.load %arg2[%c0_1, %c0_2] : memref<8x1xi32, #tpu.memory_space<vmem>>, vector<8x1xi32>
    %cst = arith.constant dense<0xFF800000> : vector<8xf32>
    %3 = vector.multi_reduction <maximumf>, %1, %cst [1] : vector<8x256xf32> to vector<8xf32>
    %4 = vector.shape_cast %3 : vector<8xf32> to vector<8x1xf32>
    %5 = vector.broadcast %4 : vector<8x1xf32> to vector<8x256xf32>
    %6 = arith.subf %1, %5 : vector<8x256xf32>
    %7 = math.exp %6 : vector<8x256xf32>
    %cst_3 = arith.constant dense<0.000000e+00> : vector<8xf32>
    %8 = vector.multi_reduction <add>, %7, %cst_3 [1] : vector<8x256xf32> to vector<8xf32>
    %9 = vector.shape_cast %8 : vector<8xf32> to vector<8x1xf32>
    %10 = math.log %9 : vector<8x1xf32>
    %11 = arith.addf %4, %10 : vector<8x1xf32>
    %12 = tpu.iota {dimensions = array<i32: 1>} : vector<8x256xi32>
    %13 = vector.broadcast %2 : vector<8x1xi32> to vector<8x256xi32>
    %14 = arith.cmpi eq, %12, %13 : vector<8x256xi32>
    %cst_4 = arith.constant 0.899999976 : f32
    %cst_5 = arith.constant 3.92156857E-4 : f32
    %15 = vector.broadcast %cst_4 : f32 to vector<8x256xf32>
    %16 = vector.broadcast %cst_5 : f32 to vector<8x256xf32>
    %17 = arith.select %14, %15, %16 : vector<8x256xi1>, vector<8x256xf32>
    %18 = arith.mulf %17, %1 : vector<8x256xf32>
    %cst_6 = arith.constant dense<0.000000e+00> : vector<8xf32>
    %19 = vector.multi_reduction <add>, %18, %cst_6 [1] : vector<8x256xf32> to vector<8xf32>
    %20 = vector.shape_cast %19 : vector<8xf32> to vector<8x1xf32>
    %21 = arith.subf %11, %20 : vector<8x1xf32>
    %c8_i32 = arith.constant 8 : i32
    %22 = arith.muli %arg0, %c8_i32 : i32
    %23 = tpu.iota {dimensions = array<i32: 0>} : vector<8x1xi32>
    %24 = vector.broadcast %22 : i32 to vector<8x1xi32>
    %25 = arith.addi %24, %23 : vector<8x1xi32>
    %c12_i32 = arith.constant 12 : i32
    %26 = vector.broadcast %c12_i32 : i32 to vector<8x1xi32>
    %27 = arith.cmpi slt, %25, %26 : vector<8x1xi32>
    %cst_7 = arith.constant 0.000000e+00 : f32
    %28 = vector.broadcast %cst_7 : f32 to vector<8x1xf32>
    %29 = arith.select %27, %21, %28 : vector<8x1xi1>, vector<8x1xf32>
    %c0_8 = arith.constant 0 : index
    %c0_9 = arith.constant 0 : index
    %30 = vector.load %arg3[%c0_8, %c0_9] : memref<8x1xf32, #tpu.memory_space<vmem>>, vector<8x1xf32>
    tpu.vector_store %arg3[%c0_8, %c0_9], %29 {strides = array<i32>} : memref<8x1xf32, #tpu.memory_space<vmem>>, vector<8x1xf32>,
    return
  }
  func.func @transform_0(%arg0: i32) -> (i32, i32) {
    %c0_i32 = arith.constant 0 : i32
    %c0_i32_0 = arith.constant 0 : i32
    return %arg0, %c0_i32 : i32, i32
  }
  func.func @transform_1(%arg0: i32) -> (i32, i32) {
    %c0_i32 = arith.constant 0 : i32
    %c0_i32_0 = arith.constant 0 : i32
    return %arg0, %c0_i32 : i32, i32
  }
  func.func @transform_2(%arg0: i32) -> (i32, i32) {
    %c0_i32 = arith.constant 0 : i32
    %c0_i32_0 = arith.constant 0 : i32
    return %arg0, %c0_i32 : i32, i32
  }
}

</mosaic_0001>

<llo_original>
// kernel: tpu_custom_call.1
$region0: #{tpu_custom_call.1}
  #allocation0 [shape = 'u32[]', space=smem, size = 0x4, offset = 0x4, fixed_abs, tag = 'smem constant byte address 0x4 - core index']
  #allocation1 [shape = 'u32[72,128]{1,0:T(1,128)}', space=vmem, size = 0x9000, scoped, tag = 'internal scratch']
  %s0 = inlined_call_operand.vmem [shape: bf16[12,256], index: 0, kind: input, shape index: {}]
  %s1 = inlined_call_operand.vmem [shape: s32[12,1], index: 1, kind: input, shape index: {}]
  %s2 = inlined_call_operand.vmem [shape: f32[12,1], index: 2, kind: output, shape index: {}]
  %s3 = sld [smem:[#allocation0]]
  $region41: #{tpu_custom_call.1} parent=0
    _
  %s5 = ssub.s32 1, %s3
  %s6 = scalar_select 0, %s5, %s3
  loop: start=0, step=1, limit=4
  $region2: #{tpu_custom_call.1} parent=0 // loop_pre_header
    _
  $region3: #{tpu_custom_call.1} parent=0 // loop_header
    %s8 = sphi 0, %s12
    %p9 = scmp.ge.s32.totalorder %s8, 4
    %s18 = sphi 0, %s20
    %s21 = sphi 0, %s18
    %s22 = sphi 0, %s21
    %s38 = sphi 0, %s22
    %s44 = sphi 0, %s46
    %s47 = sphi 0, %s44
    %s48 = sphi 0, %s47
    %s64 = sphi 0, %s48
    %s70 = sphi 0, %s72
    %s73 = sphi 0, %s70
    %s74 = sphi 0, %s73
    %s90 = sphi 0, %s74
  $region4: #{tpu_custom_call.1} parent=0 // loop_header_branch
    %11 = sbr.rel (%p9) target = $region8
  $region5: #{tpu_custom_call.1} parent=0 // loop_body
    %s13 = ssub.s32 %s8, 1
    %s14 = ssub.s32 %s8, 2
    %s15 = sadd.s32 %s8, 1
    %s16 = ssub.s32 %s8, %s15
    %p17 = scmp.eq.s32.totalorder %s16, 0
    %s19 = sadd.s32 %s18, 1
    %s20 = scalar_select %p17, %s18, %s19
    %p23 = pneg %p17
    %p24 = scmp.eq.s32.totalorder %s8, 1
    %p25 = por %p23, %p24
    %p26 = scmp.ne.s32.totalorder %s18, %s21
    %p27 = scmp.eq.s32.totalorder %s8, 0
    %p28 = por %p26, %p27
    %p29 = scmp.ne.s32.totalorder %s18, %s21
    %p30 = scmp.eq.s32.totalorder %s13, 1
    %p31 = por %p29, %p30
    %p32 = scmp.ne.s32.totalorder %s21, %s22
    %p33 = scmp.eq.s32.totalorder %s13, 0
    %p34 = por %p32, %p33
    %p35 = scmp.ne.s32.totalorder %s21, %s22
    %p36 = scmp.eq.s32.totalorder %s14, 1
    %p37 = por %p35, %p36
    %p39 = scmp.ne.s32.totalorder %s22, %s38
    %p40 = scmp.eq.s32.totalorder %s14, 0
    %p41 = por %p39, %p40
    %s42 = ssub.s32 %s8, %s15
    %p43 = scmp.eq.s32.totalorder %s42, 0
    %s45 = sadd.s32 %s44, 1
    %s46 = scalar_select %p43, %s44, %s45
    %p49 = pneg %p43
    %p50 = scmp.eq.s32.totalorder %s8, 1
    %p51 = por %p49, %p50
    %p52 = scmp.ne.s32.totalorder %s44, %s47
    %p53 = scmp.eq.s32.totalorder %s8, 0
    %p54 = por %p52, %p53
    %p55 = scmp.ne.s32.totalorder %s44, %s47
    %p56 = scmp.eq.s32.totalorder %s13, 1
    %p57 = por %p55, %p56
    %p58 = scmp.ne.s32.totalorder %s47, %s48
    %p59 = scmp.eq.s32.totalorder %s13, 0
    %p60 = por %p58, %p59
    %p61 = scmp.ne.s32.totalorder %s47, %s48
    %p62 = scmp.eq.s32.totalorder %s14, 1
    %p63 = por %p61, %p62
    %p65 = scmp.ne.s32.totalorder %s48, %s64
    %p66 = scmp.eq.s32.totalorder %s14, 0
    %p67 = por %p65, %p66
    %s68 = ssub.s32 %s8, %s15
    %p69 = scmp.eq.s32.totalorder %s68, 0
    %s71 = sadd.s32 %s70, 1
    %s72 = scalar_select %p69, %s70, %s71
    %p75 = pneg %p69
    %p76 = scmp.eq.s32.totalorder %s8, 1
    %p77 = por %p75, %p76
    %p78 = scmp.ne.s32.totalorder %s70, %s73
    %p79 = scmp.eq.s32.totalorder %s8, 0
    %p80 = por %p78, %p79
    %p81 = scmp.ne.s32.totalorder %s70, %s73
    %p82 = scmp.eq.s32.totalorder %s13, 1
    %p83 = por %p81, %p82
    %p84 = scmp.ne.s32.totalorder %s73, %s74
    %p85 = scmp.eq.s32.totalorder %s13, 0
    %p86 = por %p84, %p85
    %p87 = scmp.ne.s32.totalorder %s73, %s74
    %p88 = scmp.eq.s32.totalorder %s14, 1
    %p89 = por %p87, %p88
    %p91 = scmp.ne.s32.totalorder %s74, %s90
    %p92 = scmp.eq.s32.totalorder %s14, 0
    %p93 = por %p91, %p92
    %p94 = scmp.le.s32.totalorder 1, %s8
    %p95 = scmp.lt.s32.totalorder %s8, 3
    %p96 = pnand %p94, %p95
    %p97 = pneg %p96
    // Predicated region
    $region9: #{tpu_custom_call.1} parent=5 // pred_check
      _
    $region10: #{tpu_custom_call.1} parent=5 // pred_check_branch
      %99 = sbr.rel (%p96) target = $region12
    $region11: #{tpu_custom_call.1} parent=5 // pred_region
      %s100 = ssub.s32 %s8, 1
    $region12: #{tpu_custom_call.1} parent=5 // pred_fallthru
      _
    %p101 = scmp.lt.s32.totalorder %s8, 2
    // Predicated region
    $region13: #{tpu_custom_call.1} parent=5 // pred_check
      %p102 = pneg %p101
    $region14: #{tpu_custom_call.1} parent=5 // pred_check_branch
      %104 = sbr.rel (%p102) target = $region16
    $region15: #{tpu_custom_call.1} parent=5 // pred_region
      // Predicated region
      $region17: #{tpu_custom_call.1} parent=15 // pred_check
        %p105 = pneg %p28
      $region18: #{tpu_custom_call.1} parent=15 // pred_check_branch
        %107 = sbr.rel (%p105) target = $region20
      $region19: #{tpu_custom_call.1} parent=15 // pred_region
        %p108 = scmp.lt.s32.totalorder %s8, 1
        %s109 = scalar_select %p108, %s8, 1
        %s110 = smul.addr %s109, 2
        %s111 = smul.addr %s110, 4
        %s112 = scalar_lea.vmem %s0, %s111
      $region20: #{tpu_custom_call.1} parent=15 // pred_fallthru
        _
      // Predicated region
      $region21: #{tpu_custom_call.1} parent=15 // pred_check
        %p113 = pneg %p54
      $region22: #{tpu_custom_call.1} parent=15 // pred_check_branch
        %115 = sbr.rel (%p113) target = $region24
      $region23: #{tpu_custom_call.1} parent=15 // pred_region
        %p116 = scmp.lt.s32.totalorder %s8, 1
        %s117 = scalar_select %p116, %s8, 1
        %s118 = smul.addr %s117, 8
        %s119 = scalar_lea.vmem %s1, %s118
      $region24: #{tpu_custom_call.1} parent=15 // pred_fallthru
        _
    $region16: #{tpu_custom_call.1} parent=5 // pred_fallthru
      _
    %p120 = scmp.le.s32.totalorder 1, %s8
    %p121 = scmp.lt.s32.totalorder %s8, 3
    %p122 = pnand %p120, %p121
    %p123 = pneg %p122
    // Predicated region
    $region25: #{tpu_custom_call.1} parent=5 // pred_check
      _
    $region26: #{tpu_custom_call.1} parent=5 // pred_check_branch
      %125 = sbr.rel (%p122) target = $region28
    $region27: #{tpu_custom_call.1} parent=5 // pred_region
      %s126 = ssub.s32 %s8, 1
      %p127 = scmp.lt.s32.totalorder %s13, 1
      %s128 = scalar_select %p127, %s13, 1
      %s129 = smul.addr %s128, 2
      %s130 = smul.addr %s129, 4
      %s131 = scalar_lea.vmem %s0, %s130
      %p132 = pneg %p34
      %p133 = pneg %p31
      %p134 = scmp.lt.s32.totalorder %s13, 1
      %s135 = scalar_select %p134, %s13, 1
      %s136 = smul.addr %s135, 8
      %s137 = scalar_lea.vmem %s1, %s136
      %p138 = pneg %p60
      %p139 = pneg %p57
      %p140 = pneg %p86
      %p141 = pneg %p83
      %p142 = scmp.lt.s32.totalorder %s13, 1
      %s143 = scalar_select %p142, %s13, 1
      %s144 = smul.addr %s143, 8
      %s145 = scalar_lea.vmem %s2, %s144
      %p146 = scmp.lt.s32.totalorder %s13, 1
      %s147 = scalar_select %p146, %s13, 1
      %s148 = smul.addr %s147, 2
      %s149 = smul.addr %s148, 4
      %s150 = scalar_lea.vmem %s0, %s149
      %p151 = scmp.lt.s32.totalorder %s13, 1
      %s152 = scalar_select %p151, %s13, 1
      %s153 = smul.addr %s152, 8
      %s154 = scalar_lea.vmem %s1, %s153
      %p155 = scmp.lt.s32.totalorder %s13, 1
      %s156 = scalar_select %p155, %s13, 1
      %s157 = smul.addr %s156, 8
      %s158 = scalar_lea.vmem %s2, %s157
      %v159 = vld [vmem:[%s150] sm:$0xff]
      %v160 = vunpack.c.l.bf16 %v159
      %v161 = vunpack.c.h.bf16 %v159
      %v162 = vld [vmem:[%s154] sm:$0xff]
      %v163 = vmax.f32 %v160, %v161
      %164 = vmax.xlane.f32.xlu0 %v163
      %v165 = vpop.xlane.xlu0 %164
      %v166 = vsub.f32 %v160, %v165
      %v167 = vsub.f32 %v161, %v165
      %v168 = vmul.f32 %v166, 1.442695
      %v169 = vpow.pop %v168
      %v170 = vmul.f32 %v167, 1.442695
      %v171 = vpow.pop %v170
      %v172 = vadd.f32 %v169, %v171
      %173 = vadd.xlane.f32.xlu0 %v172
      %v174 = vpop.xlane.xlu0 %173
      %v175 = vlog2.pop %v174
      %v176 = vmul.f32 %v175, 0.6931472
      %v177 = vadd.f32 %v165, %v176
      %v178 = vlaneseq
      %v179 = vand.u32 %v178, 127
      %v180 = vadd.s32 %v179, 128
      %181 = vset.pattern.permute.xlu0 0
      %182 = vperm.xlu0 %181, %v162
      %v183 = vpop.permute.xlu0 %182
      %vm184 = vcmp.eq.s32.totalorder %v179, %v183
      %vm185 = vcmp.eq.s32.totalorder %v180, %v183
      %v186 = vsel %vm184, 0.9, 0.00039215686
      %v187 = vsel %vm185, 0.9, 0.00039215686
      %v188 = vmul.f32 %v186, %v160
      %v189 = vmul.f32 %v187, %v161
      %v190 = vadd.f32 %v188, %v189
      %191 = vadd.xlane.f32.xlu0 %v190
      %v192 = vpop.xlane.xlu0 %191
      %v193 = vsub.f32 %v177, %v192
      %s194 = smul.u32 %s13, 8
      %v195 = vlaneseq
      %v196 = vshrl.u32 %v195, 7
      %v197 = vstv %s194
      %v198 = vadd.s32 %v197, %v196
      %vm199 = vcmp.lt.s32.totalorder %v198, 12
      %v200 = vsel %vm199, %v193, 0.0
      %vm201 = vcmask 7168
      %202 = vst.msk [vmem:[%s158] sm:$0xff] %vm201, %v200
      %p203 = scmp.lt.s32.totalorder %s13, 1
      %s204 = scalar_select %p203, %s13, 1
      %s205 = smul.addr %s204, 8
      %s206 = scalar_lea.vmem %s2, %s205
      // Predicated region
      $region29: #{tpu_custom_call.1} parent=27 // pred_check
        %p207 = pneg %p83
      $region30: #{tpu_custom_call.1} parent=27 // pred_check_branch
        %209 = sbr.rel (%p207) target = $region32
      $region31: #{tpu_custom_call.1} parent=27 // pred_region
        _
      $region32: #{tpu_custom_call.1} parent=27 // pred_fallthru
        _
    $region28: #{tpu_custom_call.1} parent=5 // pred_fallthru
      _
    %p210 = scmp.le.s32.totalorder 2, %s8
    // Predicated region
    $region33: #{tpu_custom_call.1} parent=5 // pred_check
      %p211 = pneg %p210
    $region34: #{tpu_custom_call.1} parent=5 // pred_check_branch
      %213 = sbr.rel (%p211) target = $region36
    $region35: #{tpu_custom_call.1} parent=5 // pred_region
      %s214 = ssub.s32 %s8, 2
      // Predicated region
      $region37: #{tpu_custom_call.1} parent=35 // pred_check
        %p215 = pneg %p89
      $region38: #{tpu_custom_call.1} parent=35 // pred_check_branch
        %217 = sbr.rel (%p215) target = $region40
      $region39: #{tpu_custom_call.1} parent=35 // pred_region
        %p218 = scmp.lt.s32.totalorder %s14, 1
        %s219 = scalar_select %p218, %s14, 1
        %s220 = smul.addr %s219, 8
        %s221 = scalar_lea.vmem %s2, %s220
      $region40: #{tpu_custom_call.1} parent=35 // pred_fallthru
        _
    $region36: #{tpu_custom_call.1} parent=5 // pred_fallthru
      _
  $region6: #{tpu_custom_call.1} parent=0 // loop_footer
    %s12 = sadd.s32 1, %s8
  $region7: #{tpu_custom_call.1} parent=0 // loop_footer_branch
    %7 = sbr.rel target = $region3
  $region8: #{tpu_custom_call.1} parent=0 // loop_exit
    _

</llo_original>
